<compile_context>
chip_gen: v7x
topology: tpu7x:2x2x1
jax: 0.10.0
libtpu: 0.0.40
codegen_flags: <defaults>
</compile_context>

<pallas_src>
import jax
import jax.numpy as jnp
from jax import lax
from jax.experimental import pallas as pl
from jax.experimental.pallas import tpu as pltpu


def _round_up(x, m):
    return ((x + m - 1) // m) * m


def _largest_tile(size, candidates):
    for c in candidates:
        if size % c == 0:
            return c
    return size


# ---------------------------------------------------------------------------
# Stage 1: pair-invariant terms (hoisted matmuls).
#   out = ReLU(x @ W_pre + b_pre) @ W_post_half + b_out
# ---------------------------------------------------------------------------
def _terms_kernel(x_ref, wpre_ref, bpre_ref, wpost_ref, bout_ref, out_ref):
    x = x_ref[...].astype(jnp.bfloat16)                             # (TR, R)
    pre = jnp.dot(x, wpre_ref[...], preferred_element_type=jnp.float32)
    pre = jnp.maximum(pre + bpre_ref[...], 0.0)                     # f32 epilogue
    term = jnp.dot(pre.astype(jnp.bfloat16), wpost_ref[...],
                   preferred_element_type=jnp.float32)              # (TR, Q)
    out_ref[...] = term + bout_ref[...]


def _compute_terms(x, w_pre_bf16, b_pre, w_post_bf16, b_out, *, tile_rows):
    rows, R = x.shape
    P = w_pre_bf16.shape[1]
    Q = w_post_bf16.shape[1]
    return pl.pallas_call(
        _terms_kernel,
        out_shape=jax.ShapeDtypeStruct((rows, Q), jnp.float32),
        grid=(rows // tile_rows,),
        in_specs=[
            pl.BlockSpec((tile_rows, R), lambda i: (i, 0)),
            pl.BlockSpec((R, P), lambda i: (0, 0)),   # weights stay resident
            pl.BlockSpec((1, P), lambda i: (0, 0)),
            pl.BlockSpec((P, Q), lambda i: (0, 0)),
            pl.BlockSpec((1, Q), lambda i: (0, 0)),
        ],
        out_specs=pl.BlockSpec((tile_rows, Q), lambda i: (i, 0)),
        compiler_params=pltpu.CompilerParams(
            dimension_semantics=("parallel",)),
    )(x, w_pre_bf16, b_pre, w_post_bf16, b_out)


# ---------------------------------------------------------------------------
# Stage 2: pairwise relation scores, streamed per batch row.
#   out[b, n] = sigmoid( ReLU(att_term[b] + mem_term[n]) . w_rel + b_rel )
# ---------------------------------------------------------------------------
_N_CHUNK = 128  # inner N chunk: lane-width; per-b working set ~16 f32 vregs


def _pairwise_kernel(att_ref, mem_ref, wrel_ref, brel_ref, out_ref):
    tb, q = att_ref.shape
    tn = mem_ref.shape[0]
    n_chunks = tn // _N_CHUNK

    # Hoisted once per grid step: w_rel replicated to a full sublane group.
    w8 = jnp.broadcast_to(wrel_ref[...], (8, q))      # (8, Q) f32
    b_rel = brel_ref[0, 0]                            # scalar from SMEM

    def b_body(b, carry):
        a_row = att_ref[pl.ds(b, 1), :]               # (1, Q); b_post folded in

        def n_body(c, carry2):
            off = pl.multiple_of(c * _N_CHUNK, _N_CHUNK)
            m_chunk = mem_ref[pl.ds(off, _N_CHUNK), :]          # (NC, Q) f32
            post = jnp.maximum(m_chunk + a_row, 0.0)            # (NC, Q) f32
            # f32 Q-contraction on the MXU; result is lane-oriented, so row 0
            # stores straight into output row b without any XLU transpose.
            prod = lax.dot_general(
                w8, post,                                       # (8,Q)x(NC,Q)^T
                dimension_numbers=(((1,), (1,)), ((), ())),
                preferred_element_type=jnp.float32)             # (8, NC)
            logits = prod[0:1, :] + b_rel                       # (1, NC)
            out_ref[pl.ds(b, 1), pl.ds(off, _N_CHUNK)] = (
                jax.nn.sigmoid(logits).astype(out_ref.dtype))
            return carry2

        return lax.fori_loop(0, n_chunks, n_body, carry, unroll=True)

    lax.fori_loop(0, tb, b_body, 0, unroll=(tb <= 16))


def _pad_rows(x, rows_padded):
    pad = rows_padded - x.shape[0]
    if pad:
        x = jnp.pad(x, ((0, pad), (0, 0)))
    return x


def base_relation_forward(att_res, nouns_memory, params):
    B = att_res.shape[0]
    N = nouns_memory.shape[0]
    Q = params["w_post_att"].shape[1]

    # Padded extents and tiles: divisors of the padded sizes, so no wasted
    # compute beyond the minimal 8 / 128 rounding.
    Bp = _round_up(B, 8)
    Np = _round_up(N, 128)
    tile_b = _largest_tile(Bp, (256, 128, 64, 32, 16, 8))
    tile_n = _largest_tile(Np, (512, 384, 256, 128))

    att_p = _pad_rows(att_res, Bp)
    mem_p = _pad_rows(nouns_memory, Np)

    # bf16 weights for the stage-1 MXU matmuls (accumulation stays f32).
    w_pre = params["w_pre"].astype(jnp.bfloat16)
    w_post_att = params["w_post_att"].astype(jnp.bfloat16)
    w_post_mem = params["w_post_mem"].astype(jnp.bfloat16)

    # Stage-1 row tiles decoupled from the pairwise tiles (MXU M-utilisation).
    tr_att = _largest_tile(Bp, (512, 256, 128, 64, 32, 16, 8))
    tr_mem = _largest_tile(Np, (512, 256, 128))

    # Pair-invariant partial products, computed once (b_post folded into the
    # att term so the pairwise kernel only adds / ReLUs / contracts).
    att_term = _compute_terms(att_p, w_pre, params["b_pre"], w_post_att,
                              params["b_post"], tile_rows=tr_att)
    mem_term = _compute_terms(mem_p, w_pre, params["b_pre"], w_post_mem,
                              jnp.zeros_like(params["b_post"]),
                              tile_rows=tr_mem)

    w_rel = params["w_rel"].astype(jnp.float32)       # (1, Q) — f32 contraction
    b_rel = params["b_rel"].astype(jnp.float32)       # (1, 1) scalar -> SMEM

    out_padded = pl.pallas_call(
        _pairwise_kernel,
        out_shape=jax.ShapeDtypeStruct((Bp, Np), jnp.float32),
        # N-tiles first (more steps -> v7x megacore has something to shard);
        # B-tiles innermost so each mem_term tile is DMA'd only once overall.
        grid=(Np // tile_n, Bp // tile_b),
        in_specs=[
            pl.BlockSpec((tile_b, Q), lambda i, j: (j, 0)),
            pl.BlockSpec((tile_n, Q), lambda i, j: (i, 0)),
            pl.BlockSpec((1, Q), lambda i, j: (0, 0)),
            pl.BlockSpec(memory_space=pltpu.MemorySpace.SMEM),
        ],
        out_specs=pl.BlockSpec((tile_b, tile_n), lambda i, j: (j, i)),
        compiler_params=pltpu.CompilerParams(
            dimension_semantics=("parallel", "parallel")),
    )(att_term, mem_term, w_rel, b_rel)

    return out_padded[:B, :N]


def reference_forward(att_res, nouns_memory, params):
    """Pure-JAX f32 reference matching the (intended) PyTorch forward."""
    att_pre = jax.nn.relu(att_res @ params["w_pre"] + params["b_pre"])
    mem_pre = jax.nn.relu(nouns_memory @ params["w_pre"] + params["b_pre"])
    B, N = att_res.shape[0], nouns_memory.shape[0]
    mem_ext = jnp.broadcast_to(mem_pre[None, :, :], (B, N, mem_pre.shape[1]))
    att_ext = jnp.broadcast_to(att_pre[:, None, :], (B, N, att_pre.shape[1]))
    pairs = jnp.concatenate([mem_ext, att_ext], axis=2).reshape(B * N, -1)
    w_post = jnp.concatenate([params["w_post_mem"], params["w_post_att"]], axis=0)
    post = jax.nn.relu(pairs @ w_post + params["b_post"])
    rel = jax.nn.sigmoid(post @ params["w_rel"].T + params["b_rel"][0, 0])
    return rel.reshape(B, N)


if __name__ == "__main__":
    # Small config consistent with the module's __init__ (feature dims chosen
    # lane-dense; B / N intentionally NOT tile multiples to exercise padding).
    batch_size = 6       # batch of att_res vectors
    nouns_size = 200     # opts.nouns_size
    rnn_size = 128       # opts.rnn_size
    pre_size = 128       # opts.relation_pre_fc_size
    post_size = 128      # opts.relation_post_fc_size (== pre_size; see note)

    key = jax.random.PRNGKey(0)
    keys = jax.random.split(key, 10)

    att_res = jax.random.normal(keys[0], (batch_size, rnn_size), jnp.float32)
    nouns_memory = jax.random.normal(keys[1], (nouns_size, rnn_size), jnp.float32)

    def init_w(k, shape):
        return jax.random.normal(k, shape, jnp.float32) * 0.1

    params = {
        "w_pre":      init_w(keys[2], (rnn_size, pre_size)),
        "b_pre":      init_w(keys[3], (1, pre_size)),
        # post_fc weight Linear(2*pre, post), split into the memory half
        # (rows 0:pre) and the att half (rows pre:2*pre).
        "w_post_mem": init_w(keys[4], (pre_size, post_size)),
        "w_post_att": init_w(keys[5], (pre_size, post_size)),
        "b_post":     init_w(keys[6], (1, post_size)),
        "w_rel":      init_w(keys[7], (1, post_size)),   # Linear(post, 1) weight
        "b_rel":      init_w(keys[8], (1, 1)),
    }

    out = base_relation_forward(att_res, nouns_memory, params)
    out = jax.block_until_ready(out)

    ref = reference_forward(att_res, nouns_memory, params)
    assert out.shape == (batch_size, nouns_size)
    # Stage-1 bf16 MXU matmuls (f32 accumulation) vs f32 reference; the final
    # w_rel contraction is now f32, so the error is dominated by stage 1.
    max_err = float(jnp.max(jnp.abs(out - ref)))
    assert max_err < 6e-2, f"mismatch vs reference (max_err={max_err})"

    print("KERNEL_OK")
</pallas_src>

<mosaic_0001>
module attributes {stable_mosaic.version = 11 : i64} {
  func.func @_terms_kernel(%arg0: i32, %arg1: memref<8x128xf32, #tpu.memory_space<vmem>>, %arg2: memref<128x128xbf16, #tpu.memory_space<vmem>>, %arg3: memref<1x128xf32, #tpu.memory_space<vmem>>, %arg4: memref<128x128xbf16, #tpu.memory_space<vmem>>, %arg5: memref<1x128xf32, #tpu.memory_space<vmem>>, %arg6: memref<8x128xf32, #tpu.memory_space<vmem>>) attributes {dimension_semantics = [#tpu.dimension_semantics<parallel>], iteration_bounds = array<i64: 1>, scalar_prefetch = 0 : i64, scratch_operands = 0 : i64, tpu.core_type = #tpu.core_type<tc>, window_params = [{transform_indices = @transform_0, window_bounds = array<i64: 8, 128>}, {pipeline_mode = #tpu.pipeline_mode<synchronous>, transform_indices = @transform_1, window_bounds = array<i64: 128, 128>}, {pipeline_mode = #tpu.pipeline_mode<synchronous>, transform_indices = @transform_2, window_bounds = array<i64: 1, 128>}, {pipeline_mode = #tpu.pipeline_mode<synchronous>, transform_indices = @transform_3, window_bounds = array<i64: 128, 128>}, {pipeline_mode = #tpu.pipeline_mode<synchronous>, transform_indices = @transform_4, window_bounds = array<i64: 1, 128>}, {transform_indices = @transform_5, window_bounds = array<i64: 8, 128>}]} {
    %c0 = arith.constant 0 : index
    %c0_0 = arith.constant 0 : index
    %0 = vector.load %arg1[%c0, %c0_0] : memref<8x128xf32, #tpu.memory_space<vmem>>, vector<8x128xf32>
    %1 = arith.truncf %0 : vector<8x128xf32> to vector<8x128xbf16>
    %c0_1 = arith.constant 0 : index
    %c0_2 = arith.constant 0 : index
    %2 = vector.load %arg2[%c0_1, %c0_2] : memref<128x128xbf16, #tpu.memory_space<vmem>>, vector<128x128xbf16>
    %cst = arith.constant dense<0.000000e+00> : vector<8x128xf32>
    %3 = tpu.matmul %1, %2, %cst {dimension_numbers = #tpu.dot_dimension_numbers<[1], [0], [0], [1], [0, 0, 1, 1], [], []>} : vector<8x128xbf16>, vector<128x128xbf16>, vector<8x128xf32> -> vector<8x128xf32>
    %c0_3 = arith.constant 0 : index
    %c0_4 = arith.constant 0 : index
    %4 = vector.load %arg3[%c0_3, %c0_4] : memref<1x128xf32, #tpu.memory_space<vmem>>, vector<1x128xf32>
    %5 = vector.broadcast %4 : vector<1x128xf32> to vector<8x128xf32>
    %6 = arith.addf %3, %5 : vector<8x128xf32>
    %cst_5 = arith.constant 0.000000e+00 : f32
    %7 = vector.broadcast %cst_5 : f32 to vector<8x128xf32>
    %8 = arith.maximumf %6, %7 : vector<8x128xf32>
    %9 = arith.truncf %8 : vector<8x128xf32> to vector<8x128xbf16>
    %c0_6 = arith.constant 0 : index
    %c0_7 = arith.constant 0 : index
    %10 = vector.load %arg4[%c0_6, %c0_7] : memref<128x128xbf16, #tpu.memory_space<vmem>>, vector<128x128xbf16>
    %cst_8 = arith.constant dense<0.000000e+00> : vector<8x128xf32>
    %11 = tpu.matmul %9, %10, %cst_8 {dimension_numbers = #tpu.dot_dimension_numbers<[1], [0], [0], [1], [0, 0, 1, 1], [], []>} : vector<8x128xbf16>, vector<128x128xbf16>, vector<8x128xf32> -> vector<8x128xf32>
    %c0_9 = arith.constant 0 : index
    %c0_10 = arith.constant 0 : index
    %12 = vector.load %arg5[%c0_9, %c0_10] : memref<1x128xf32, #tpu.memory_space<vmem>>, vector<1x128xf32>
    %13 = vector.broadcast %12 : vector<1x128xf32> to vector<8x128xf32>
    %14 = arith.addf %11, %13 : vector<8x128xf32>
    %c0_11 = arith.constant 0 : index
    %c0_12 = arith.constant 0 : index
    %15 = vector.load %arg6[%c0_11, %c0_12] : memref<8x128xf32, #tpu.memory_space<vmem>>, vector<8x128xf32>
    tpu.vector_store %arg6[%c0_11, %c0_12], %14 {strides = array<i32>} : memref<8x128xf32, #tpu.memory_space<vmem>>, vector<8x128xf32>,
    return
  }
  func.func @transform_0(%arg0: i32) -> (i32, i32) {
    %c0_i32 = arith.constant 0 : i32
    %c0_i32_0 = arith.constant 0 : i32
    return %arg0, %c0_i32 : i32, i32
  }
  func.func @transform_1(%arg0: i32) -> (i32, i32) {
    %c0_i32 = arith.constant 0 : i32
    %c0_i32_0 = arith.constant 0 : i32
    %c0_i32_1 = arith.constant 0 : i32
    return %c0_i32, %c0_i32_0 : i32, i32
  }
  func.func @transform_2(%arg0: i32) -> (i32, i32) {
    %c0_i32 = arith.constant 0 : i32
    %c0_i32_0 = arith.constant 0 : i32
    %c0_i32_1 = arith.constant 0 : i32
    return %c0_i32, %c0_i32_0 : i32, i32
  }
  func.func @transform_3(%arg0: i32) -> (i32, i32) {
    %c0_i32 = arith.constant 0 : i32
    %c0_i32_0 = arith.constant 0 : i32
    %c0_i32_1 = arith.constant 0 : i32
    return %c0_i32, %c0_i32_0 : i32, i32
  }
  func.func @transform_4(%arg0: i32) -> (i32, i32) {
    %c0_i32 = arith.constant 0 : i32
    %c0_i32_0 = arith.constant 0 : i32
    %c0_i32_1 = arith.constant 0 : i32
    return %c0_i32, %c0_i32_0 : i32, i32
  }
  func.func @transform_5(%arg0: i32) -> (i32, i32) {
    %c0_i32 = arith.constant 0 : i32
    %c0_i32_0 = arith.constant 0 : i32
    return %arg0, %c0_i32 : i32, i32
  }
}

</mosaic_0001>

<llo_original>
// kernel: tpu_custom_call.1
$region0: #{tpu_custom_call.1}
  #allocation0 [shape = 'u32[]', space=smem, size = 0x4, offset = 0x4, fixed_abs, tag = 'smem constant byte address 0x4 - core index']
  #allocation1 [shape = 'u32[144,128]{1,0:T(1,128)}', space=vmem, size = 0x12000, scoped, tag = 'internal scratch']
  %s0 = inlined_call_operand.hbm [shape: f32[8,128], index: 0, kind: input, shape index: {}]
  %s1 = inlined_call_operand.hbm [shape: bf16[128,128], index: 1, kind: input, shape index: {}]
  %s2 = inlined_call_operand.vmem [shape: f32[1,128], index: 2, kind: input, shape index: {}]
  %s3 = inlined_call_operand.hbm [shape: bf16[128,128], index: 3, kind: input, shape index: {}]
  %s4 = inlined_call_operand.vmem [shape: f32[1,128], index: 4, kind: input, shape index: {}]
  %s5 = inlined_call_operand.hbm [shape: f32[8,128], index: 5, kind: output, shape index: {}]
  %s6 = sld [smem:[#allocation0]]
  $region42: #{tpu_custom_call.1} parent=0
    _
  %s8 = ssub.s32 1, %s6
  %s9 = scalar_select 0, %s8, %s6
  $region1: #{tpu_custom_call.1} parent=0
    #allocation2 [shape = 'u8[4096]{0}', space=vmem, size = 0x1000, scoped, tag = 'input window, operand 0, single buffered']
    #allocation3 [shape = 's32[1]{0}', space=sflag, size = 0x4, scoped, tag = 'scoped memory for tpu_custom_call.1']
    #allocation4 [shape = 's32[1]{0}', space=sflag, size = 0x4, scoped, tag = 'scoped memory for tpu_custom_call.1']
    #allocation5 [shape = 'u8[32768]{0}', space=vmem, size = 0x8000, scoped, tag = 'input window, operand 1, single buffered']
    #allocation6 [shape = 's32[1]{0}', space=sflag, size = 0x4, scoped, tag = 'scoped memory for tpu_custom_call.1']
    #allocation7 [shape = 'u8[32768]{0}', space=vmem, size = 0x8000, scoped, tag = 'input window, operand 3, single buffered']
    #allocation8 [shape = 'u8[4096]{0}', space=vmem, size = 0x1000, scoped, tag = 'output window, operand 0, single buffered']
    %10 = vsyncpa [#allocation3], 0
    %11 = vsyncpa [#allocation6], 0
    %12 = vsyncpa [#allocation4], 0
    // Predicated region
    $region2: #{tpu_custom_call.1} parent=1 // pred_check
      _
    $region3: #{tpu_custom_call.1} parent=1 // pred_check_branch
      %14 = sbr.rel (0) target = $region5
    $region4: #{tpu_custom_call.1} parent=1 // pred_region
      %s16 = ssub.s32 128, 128
      %17 = vsyncadd [#allocation3], %s16
      %s19 = sshll.u32 [#allocation2], 4
      %s20 = int_to_ptr.vmem [resolvable:$true] %s19
      %22 = dma.hbm_to_vmem [thread:$0]  %s0, 128, %s20, [#allocation3]
    $region5: #{tpu_custom_call.1} parent=1 // pred_fallthru
      _
    // Predicated region
    $region6: #{tpu_custom_call.1} parent=1 // pred_check
      _
    $region7: #{tpu_custom_call.1} parent=1 // pred_check_branch
      %24 = sbr.rel (0) target = $region9
    $region8: #{tpu_custom_call.1} parent=1 // pred_region
      %s26 = ssub.s32 1024, 1024
      %27 = vsyncadd [#allocation6], %s26
      %s28 = sshll.u32 [#allocation5], 4
      %s29 = int_to_ptr.vmem [resolvable:$true] %s28
      %34 = dma.hbm_to_vmem [thread:$0]  %s1, 1024, %s29, [#allocation6], 64, 64, 4
    $region9: #{tpu_custom_call.1} parent=1 // pred_fallthru
      _
    // Predicated region
    $region10: #{tpu_custom_call.1} parent=1 // pred_check
      _
    $region11: #{tpu_custom_call.1} parent=1 // pred_check_branch
      %36 = sbr.rel (0) target = $region13
    $region12: #{tpu_custom_call.1} parent=1 // pred_region
      _
    $region13: #{tpu_custom_call.1} parent=1 // pred_fallthru
      _
    // Predicated region
    $region14: #{tpu_custom_call.1} parent=1 // pred_check
      _
    $region15: #{tpu_custom_call.1} parent=1 // pred_check_branch
      %38 = sbr.rel (0) target = $region17
    $region16: #{tpu_custom_call.1} parent=1 // pred_region
      %s40 = ssub.s32 1024, 1024
      %41 = vsyncadd [#allocation6], %s40
      %s42 = sshll.u32 [#allocation7], 4
      %s43 = int_to_ptr.vmem [resolvable:$true] %s42
      %48 = dma.hbm_to_vmem [thread:$0]  %s3, 1024, %s43, [#allocation6], 64, 64, 4
    $region17: #{tpu_custom_call.1} parent=1 // pred_fallthru
      _
    // Predicated region
    $region18: #{tpu_custom_call.1} parent=1 // pred_check
      _
    $region19: #{tpu_custom_call.1} parent=1 // pred_check_branch
      %50 = sbr.rel (0) target = $region21
    $region20: #{tpu_custom_call.1} parent=1 // pred_region
      _
    $region21: #{tpu_custom_call.1} parent=1 // pred_fallthru
      _
    // Predicated region
    $region22: #{tpu_custom_call.1} parent=1 // pred_check
      _
    $region23: #{tpu_custom_call.1} parent=1 // pred_check_branch
      %52 = sbr.rel (0) target = $region25
    $region24: #{tpu_custom_call.1} parent=1 // pred_region
      %53 = dma.done [#allocation3], 128
    $region25: #{tpu_custom_call.1} parent=1 // pred_fallthru
      _
    // Predicated region
    $region26: #{tpu_custom_call.1} parent=1 // pred_check
      _
    $region27: #{tpu_custom_call.1} parent=1 // pred_check_branch
      %55 = sbr.rel (0) target = $region29
    $region28: #{tpu_custom_call.1} parent=1 // pred_region
      %56 = dma.done [#allocation6], 1024
    $region29: #{tpu_custom_call.1} parent=1 // pred_fallthru
      _
    // Predicated region
    $region30: #{tpu_custom_call.1} parent=1 // pred_check
      _
    $region31: #{tpu_custom_call.1} parent=1 // pred_check_branch
      %58 = sbr.rel (0) target = $region33
    $region32: #{tpu_custom_call.1} parent=1 // pred_region
      %59 = dma.done [#allocation6], 1024
    $region33: #{tpu_custom_call.1} parent=1 // pred_fallthru
      _
    %v61 = vld [vmem:[#allocation2] sm:$0xff]
    %v62 = vpack.c.bf16 %v61, %v61
    %v63 = vld [vmem:[#allocation5] sm:$0xf]
    %v64 = vld [vmem:[#allocation5 + $0x4] sm:$0xf]
    %v65 = vld [vmem:[#allocation5 + $0x8] sm:$0xf]
    %v66 = vld [vmem:[#allocation5 + $0xc] sm:$0xf]
    %v67 = vld [vmem:[#allocation5 + $0x10] sm:$0xf]
    %v68 = vld [vmem:[#allocation5 + $0x14] sm:$0xf]
    %v69 = vld [vmem:[#allocation5 + $0x18] sm:$0xf]
    %v70 = vld [vmem:[#allocation5 + $0x1c] sm:$0xf]
    %v71 = vld [vmem:[#allocation5 + $0x20] sm:$0xf]
    %v72 = vld [vmem:[#allocation5 + $0x24] sm:$0xf]
    %v73 = vld [vmem:[#allocation5 + $0x28] sm:$0xf]
    %v74 = vld [vmem:[#allocation5 + $0x2c] sm:$0xf]
    %v75 = vld [vmem:[#allocation5 + $0x30] sm:$0xf]
    %v76 = vld [vmem:[#allocation5 + $0x34] sm:$0xf]
    %v77 = vld [vmem:[#allocation5 + $0x38] sm:$0xf]
    %v78 = vld [vmem:[#allocation5 + $0x3c] sm:$0xf]
    %v79 = vld [vmem:[%s2] sm:$0x1]
    %v81 = vlaneseq
    %v82 = vshrl.u32 %v81, 7
    %v83 = vsub.s32 0, %v82
    %v84 = vrot.slane %v79, %v83
    %v102 = vunpack.c.l.b16 %v63
    %v103 = vunpack.c.l.b16 %v64
    %v104 = vunpack.c.l.b16 %v65
    %v105 = vunpack.c.l.b16 %v66
    %v106 = vunpack.c.l.b16 %v67
    %v107 = vunpack.c.l.b16 %v68
    %v108 = vunpack.c.l.b16 %v69
    %v109 = vunpack.c.l.b16 %v70
    %v110 = vunpack.c.l.b16 %v71
    %v111 = vunpack.c.l.b16 %v72
    %v112 = vunpack.c.l.b16 %v73
    %v113 = vunpack.c.l.b16 %v74
    %v114 = vunpack.c.l.b16 %v75
    %v115 = vunpack.c.l.b16 %v76
    %v116 = vunpack.c.l.b16 %v77
    %v117 = vunpack.c.l.b16 %v78
    %v118 = vpack.c.b16 %v103, %v102
    %v119 = vpack.c.b16 %v105, %v104
    %v120 = vpack.c.b16 %v107, %v106
    %v121 = vpack.c.b16 %v109, %v108
    %v122 = vpack.c.b16 %v111, %v110
    %v123 = vpack.c.b16 %v113, %v112
    %v124 = vpack.c.b16 %v115, %v114
    %v125 = vpack.c.b16 %v117, %v116
    %134 = vmatprep.subr.bf16.mxu0 0
    %135 = vmatpush1.bf16.msra.mxu0 %v118
    %136 = vmatprep.subr.bf16.mxu0 0
    %137 = vmatpush1.bf16.msra.mxu0 %v119
    %138 = vmatprep.subr.bf16.mxu0 0
    %139 = vmatpush1.bf16.msra.mxu0 %v120
    %140 = vmatprep.subr.bf16.mxu0 0
    %141 = vmatpush1.bf16.msra.mxu0 %v121
    %142 = vmatprep.subr.bf16.mxu0 0
    %143 = vmatpush1.bf16.msra.mxu0 %v122
    %144 = vmatprep.subr.bf16.mxu0 0
    %145 = vmatpush1.bf16.msra.mxu0 %v123
    %146 = vmatprep.subr.bf16.mxu0 0
    %147 = vmatpush1.bf16.msra.mxu0 %v124
    %148 = vmatprep.subr.bf16.mxu0 0
    %149 = vmatpush1.bf16.msra.mxu0 %v125
    %150 = vmatprep.subr.bf16.mxu0 0
    %151 = vmatpush1.bf16.msra.mxu0 0
    %152 = vmatprep.subr.bf16.mxu0 0
    %153 = vmatpush1.bf16.msra.mxu0 0
    %154 = vmatprep.subr.bf16.mxu0 0
    %155 = vmatpush1.bf16.msra.mxu0 0
    %156 = vmatprep.subr.bf16.mxu0 0
    %157 = vmatpush1.bf16.msra.mxu0 0
    %158 = vmatprep.subr.bf16.mxu0 0
    %159 = vmatpush1.bf16.msra.mxu0 0
    %160 = vmatprep.subr.bf16.mxu0 0
    %161 = vmatpush1.bf16.msra.mxu0 0
    %162 = vmatprep.subr.bf16.mxu0 0
    %163 = vmatpush1.bf16.msra.mxu0 0
    %164 = vmatprep.subr.bf16.mxu0 0
    %165 = vmatpush1.bf16.msra.mxu0 0
    %166 = vmatprep.mubr.bf16.mxu0 0
    %167 = vmatmul.mubr.bf16.gmra.mrb[0].mxu0 %v62
    %v168 = vpop.f32.mrb[0].mxu0
    %v169 = vadd.f32 %v84, %v168
    %v170 = vpop.f32.mrb[0].mxu0
    %v171 = vpop.f32.mrb[0].mxu0
    %v172 = vpop.f32.mrb[0].mxu0
    %173 = vdwg.mxu0
    %v174 = vmax.f32 %v169, 0.0
    %v175 = vpack.c.bf16 %v174, %v174
    %v176 = vld [vmem:[#allocation7] sm:$0xf]
    %v177 = vld [vmem:[#allocation7 + $0x4] sm:$0xf]
    %v178 = vld [vmem:[#allocation7 + $0x8] sm:$0xf]
    %v179 = vld [vmem:[#allocation7 + $0xc] sm:$0xf]
    %v180 = vld [vmem:[#allocation7 + $0x10] sm:$0xf]
    %v181 = vld [vmem:[#allocation7 + $0x14] sm:$0xf]
    %v182 = vld [vmem:[#allocation7 + $0x18] sm:$0xf]
    %v183 = vld [vmem:[#allocation7 + $0x1c] sm:$0xf]
    %v184 = vld [vmem:[#allocation7 + $0x20] sm:$0xf]
    %v185 = vld [vmem:[#allocation7 + $0x24] sm:$0xf]
    %v186 = vld [vmem:[#allocation7 + $0x28] sm:$0xf]
    %v187 = vld [vmem:[#allocation7 + $0x2c] sm:$0xf]
    %v188 = vld [vmem:[#allocation7 + $0x30] sm:$0xf]
    %v189 = vld [vmem:[#allocation7 + $0x34] sm:$0xf]
    %v190 = vld [vmem:[#allocation7 + $0x38] sm:$0xf]
    %v191 = vld [vmem:[#allocation7 + $0x3c] sm:$0xf]
    %v192 = vld [vmem:[%s4] sm:$0x1]
    %v194 = vlaneseq
    %v195 = vshrl.u32 %v194, 7
    %v196 = vsub.s32 0, %v195
    %v197 = vrot.slane %v192, %v196
    %v215 = vunpack.c.l.b16 %v176
    %v216 = vunpack.c.l.b16 %v177
    %v217 = vunpack.c.l.b16 %v178
    %v218 = vunpack.c.l.b16 %v179
    %v219 = vunpack.c.l.b16 %v180
    %v220 = vunpack.c.l.b16 %v181
    %v221 = vunpack.c.l.b16 %v182
    %v222 = vunpack.c.l.b16 %v183
    %v223 = vunpack.c.l.b16 %v184
    %v224 = vunpack.c.l.b16 %v185
    %v225 = vunpack.c.l.b16 %v186
    %v226 = vunpack.c.l.b16 %v187
    %v227 = vunpack.c.l.b16 %v188
    %v228 = vunpack.c.l.b16 %v189
    %v229 = vunpack.c.l.b16 %v190
    %v230 = vunpack.c.l.b16 %v191
    %v231 = vpack.c.b16 %v216, %v215
    %v232 = vpack.c.b16 %v218, %v217
    %v233 = vpack.c.b16 %v220, %v219
    %v234 = vpack.c.b16 %v222, %v221
    %v235 = vpack.c.b16 %v224, %v223
    %v236 = vpack.c.b16 %v226, %v225
    %v237 = vpack.c.b16 %v228, %v227
    %v238 = vpack.c.b16 %v230, %v229
    %247 = vmatprep.subr.bf16.mxu0 0
    %248 = vmatpush1.bf16.msra.mxu0 %v231
    %249 = vmatprep.subr.bf16.mxu0 0
    %250 = vmatpush1.bf16.msra.mxu0 %v232
    %251 = vmatprep.subr.bf16.mxu0 0
    %252 = vmatpush1.bf16.msra.mxu0 %v233
    %253 = vmatprep.subr.bf16.mxu0 0
    %254 = vmatpush1.bf16.msra.mxu0 %v234
    %255 = vmatprep.subr.bf16.mxu0 0
    %256 = vmatpush1.bf16.msra.mxu0 %v235
    %257 = vmatprep.subr.bf16.mxu0 0
    %258 = vmatpush1.bf16.msra.mxu0 %v236
    %259 = vmatprep.subr.bf16.mxu0 0
    %260 = vmatpush1.bf16.msra.mxu0 %v237
    %261 = vmatprep.subr.bf16.mxu0 0
    %262 = vmatpush1.bf16.msra.mxu0 %v238
    %263 = vmatprep.subr.bf16.mxu0 0
    %264 = vmatpush1.bf16.msra.mxu0 0
    %265 = vmatprep.subr.bf16.mxu0 0
    %266 = vmatpush1.bf16.msra.mxu0 0
    %267 = vmatprep.subr.bf16.mxu0 0
    %268 = vmatpush1.bf16.msra.mxu0 0
    %269 = vmatprep.subr.bf16.mxu0 0
    %270 = vmatpush1.bf16.msra.mxu0 0
    %271 = vmatprep.subr.bf16.mxu0 0
    %272 = vmatpush1.bf16.msra.mxu0 0
    %273 = vmatprep.subr.bf16.mxu0 0
    %274 = vmatpush1.bf16.msra.mxu0 0
    %275 = vmatprep.subr.bf16.mxu0 0
    %276 = vmatpush1.bf16.msra.mxu0 0
    %277 = vmatprep.subr.bf16.mxu0 0
    %278 = vmatpush1.bf16.msra.mxu0 0
    %279 = vmatprep.mubr.bf16.mxu0 0
    %280 = vmatmul.mubr.bf16.gmra.mrb[0].mxu0 %v175
    %v281 = vpop.f32.mrb[0].mxu0
    %v282 = vadd.f32 %v197, %v281
    %v283 = vpop.f32.mrb[0].mxu0
    %v284 = vpop.f32.mrb[0].mxu0
    %v285 = vpop.f32.mrb[0].mxu0
    %286 = vdwg.mxu0
    %287 = vst [vmem:[#allocation8] sm:$0xff] %v282
    // Predicated region
    $region34: #{tpu_custom_call.1} parent=1 // pred_check
      _
    $region35: #{tpu_custom_call.1} parent=1 // pred_check_branch
      %289 = sbr.rel (0) target = $region37
    $region36: #{tpu_custom_call.1} parent=1 // pred_region
      %s291 = ssub.s32 128, 128
      %292 = vsyncadd [#allocation4], %s291
      %s294 = sshll.u32 [#allocation8], 4
      %s295 = int_to_ptr.vmem [resolvable:$true] %s294
      %297 = dma.vmem_to_hbm [thread:$0]  %s295, 128, %s5, [#allocation4]
    $region37: #{tpu_custom_call.1} parent=1 // pred_fallthru
      _
    // Predicated region
    $region38: #{tpu_custom_call.1} parent=1 // pred_check
      _
    $region39: #{tpu_custom_call.1} parent=1 // pred_check_branch
      %299 = sbr.rel (0) target = $region41
    $region40: #{tpu_custom_call.1} parent=1 // pred_region
      %300 = dma.done [#allocation4], 128
    $region41: #{tpu_custom_call.1} parent=1 // pred_fallthru
      _
    %301 = vsyncpa [#allocation3], 1
    %302 = vsyncpa [#allocation6], 1
    %303 = vsyncpa [#allocation4], 1

</llo_original>
